<compile_context>
chip_gen: v6e
topology: v6e:2x2x1
jax: 0.10.0
libtpu: 0.0.40
codegen_flags: <defaults>
</compile_context>

<pallas_src>
import jax
import jax.numpy as jnp
from jax.experimental import pallas as pl
from jax.experimental.pallas import tpu as pltpu


def mlp_kernel(x_ref, w1_ref, b1_ref, w2_ref, b2_ref, o_ref):
    # Fused activation cast (VPU, hides completely under MXU slack).
    x = x_ref[...].astype(w1_ref.dtype)
    # layer1: x @ W1 (MXU, f32 accumulation) + b1 (f32), then ReLU.
    h = jnp.dot(x, w1_ref[...], preferred_element_type=jnp.float32)
    h = jnp.maximum(h + b1_ref[...], 0.0)
    # layer2: h @ W2 + b2.
    out = jnp.dot(h.astype(w2_ref.dtype), w2_ref[...],
                  preferred_element_type=jnp.float32)
    o_ref[...] = (out + b2_ref[...]).astype(o_ref.dtype)


def _round_up(n, m):
    return pl.cdiv(n, m) * m


def _choose_tile_m(batch):
    """Batch tile: short serial grid on 1-TC chips, even grid length for v7x."""
    b8 = _round_up(batch, 8)
    if b8 < 128:
        return b8                               # tiny batch: a single tile
    if b8 <= 1024:
        return _round_up(pl.cdiv(b8, 2), 8)     # two tiles -> both v7x TCs busy
    return 256                                  # large batch: 256-row tiles


def prepare_params(w1, b1, w2, b2, *, compute_dtype=jnp.float32):
    """One-time param prep (hoisted out of the forward).

    Pads the hidden dim to a lane multiple (128) and casts weights to the MXU
    compute dtype, biases to f32. Padding is exact: padded W1 columns / b1
    entries are zero (stay zero through ReLU) and padded W2 rows contribute 0.
    """
    in_size, hidden = w1.shape
    out_size = w2.shape[1]
    h_p = _round_up(hidden, 128)
    w1_p = jnp.pad(w1, ((0, 0), (0, h_p - hidden))).astype(compute_dtype)
    b1_p = jnp.pad(b1.reshape(1, hidden),
                   ((0, 0), (0, h_p - hidden))).astype(jnp.float32)
    w2_p = jnp.pad(w2, ((0, h_p - hidden), (0, 0))).astype(compute_dtype)
    b2_p = b2.reshape(1, out_size).astype(jnp.float32)
    return w1_p, b1_p, w2_p, b2_p


@jax.jit
def neural_network_forward(x, params):
    """Pallas equivalent of NeuralNetwork.forward.

    x: (B, input_size); params: output of prepare_params().
    """
    w1_p, b1_p, w2_p, b2_p = params
    B, in_size = x.shape
    h_p = w1_p.shape[1]
    out_size = w2_p.shape[1]
    out_dtype = x.dtype

    TM = _choose_tile_m(B)
    B_P = _round_up(B, TM)
    x_p = x if B_P == B else jnp.pad(x, ((0, B_P - B), (0, 0)))
    grid = (B_P // TM,)

    # Constant index_map -> the block is never re-fetched; single-buffer it.
    resident = pl.Buffered(1)

    # Explicit scoped-VMEM budget: double-buffered x/out tiles, single-buffered
    # resident params, f32 intermediate, plus headroom.
    x_bytes = 2 * TM * in_size * x.dtype.itemsize
    o_bytes = 2 * TM * out_size * jnp.dtype(out_dtype).itemsize
    p_bytes = sum(int(a.size) * a.dtype.itemsize for a in (w1_p, b1_p, w2_p, b2_p))
    h_bytes = TM * h_p * 4
    vmem_limit = int(min(max(2 * (x_bytes + o_bytes + p_bytes + h_bytes) + (4 << 20),
                             32 << 20),
                         100 << 20))

    cost = pl.CostEstimate(
        flops=2 * B * (in_size * h_p + h_p * out_size),
        transcendentals=0,
        bytes_accessed=int(B_P * in_size * x.dtype.itemsize + p_bytes
                           + B_P * out_size * jnp.dtype(out_dtype).itemsize),
    )

    out = pl.pallas_call(
        mlp_kernel,
        out_shape=jax.ShapeDtypeStruct((B_P, out_size), out_dtype),
        grid=grid,
        in_specs=[
            pl.BlockSpec((TM, in_size), lambda i: (i, 0)),                          # x: batch-tiled
            pl.BlockSpec((in_size, h_p), lambda i: (0, 0), pipeline_mode=resident),  # W1 resident
            pl.BlockSpec((1, h_p), lambda i: (0, 0), pipeline_mode=resident),        # b1 resident
            pl.BlockSpec((h_p, out_size), lambda i: (0, 0), pipeline_mode=resident), # W2 resident
            pl.BlockSpec((1, out_size), lambda i: (0, 0), pipeline_mode=resident),   # b2 resident
        ],
        out_specs=pl.BlockSpec((TM, out_size), lambda i: (i, 0)),
        compiler_params=pltpu.CompilerParams(
            dimension_semantics=("parallel",),
            vmem_limit_bytes=vmem_limit),
        cost_estimate=cost,
    )(x_p, w1_p, b1_p, w2_p, b2_p)

    # Only batch-row padding to strip (output lanes are already the real width).
    return out if B_P == B else out[:B]


def init_params(key, input_size, hidden_size, output_size, dtype=jnp.float32):
    """Deterministic init mimicking torch.nn.Linear's U(-1/sqrt(fan_in), 1/sqrt(fan_in))."""
    k1, k2, k3, k4 = jax.random.split(key, 4)
    bound1 = 1.0 / (input_size ** 0.5)
    bound2 = 1.0 / (hidden_size ** 0.5)
    w1 = jax.random.uniform(k1, (input_size, hidden_size), dtype, -bound1, bound1)
    b1 = jax.random.uniform(k2, (1, hidden_size), dtype, -bound1, bound1)
    w2 = jax.random.uniform(k3, (hidden_size, output_size), dtype, -bound2, bound2)
    b2 = jax.random.uniform(k4, (1, output_size), dtype, -bound2, bound2)
    return w1, b1, w2, b2


if __name__ == "__main__":
    # Small shapes consistent with the module; batch=200 exercises batch padding
    # (200 -> 208) and a multi-tile grid (2 tiles of 104 rows).
    batch, input_size, hidden_size, output_size = 200, 32, 64, 16

    key = jax.random.PRNGKey(0)
    kx, kp = jax.random.split(key)
    x = jax.random.normal(kx, (batch, input_size), jnp.float32)
    w1, b1, w2, b2 = init_params(kp, input_size, hidden_size, output_size)

    # Reference in plain JAX (same semantics as the PyTorch module).
    ref = jnp.maximum(x @ w1 + b1, 0.0) @ w2 + b2

    # Default (f32) path: numerical parity with the torch f32 Linear layers.
    params_f32 = jax.block_until_ready(
        prepare_params(w1, b1, w2, b2, compute_dtype=jnp.float32))
    out_f32 = jax.block_until_ready(neural_network_forward(x, params_f32))
    assert out_f32.shape == (batch, output_size)
    assert jnp.allclose(out_f32, ref, atol=1e-5, rtol=1e-5)

    # Opt-in bf16 MXU path (f32 accumulation) — looser tolerance from the cast.
    params_bf16 = jax.block_until_ready(
        prepare_params(w1, b1, w2, b2, compute_dtype=jnp.bfloat16))
    out_bf16 = jax.block_until_ready(neural_network_forward(x, params_bf16))
    assert out_bf16.shape == (batch, output_size)
    assert jnp.allclose(out_bf16, ref, atol=5e-2, rtol=5e-2)

    print("KERNEL_OK")
</pallas_src>

<mosaic_0001>
module attributes {stable_mosaic.version = 11 : i64} {
  func.func @mlp_kernel(%arg0: i32, %arg1: memref<104x32xf32, #tpu.memory_space<vmem>>, %arg2: memref<32x128xf32, #tpu.memory_space<vmem>>, %arg3: memref<1x128xf32, #tpu.memory_space<vmem>>, %arg4: memref<128x16xf32, #tpu.memory_space<vmem>>, %arg5: memref<1x16xf32, #tpu.memory_space<vmem>>, %arg6: memref<104x16xf32, #tpu.memory_space<vmem>>) attributes {dimension_semantics = [#tpu.dimension_semantics<parallel>], iteration_bounds = array<i64: 2>, scalar_prefetch = 0 : i64, scratch_operands = 0 : i64, tpu.core_type = #tpu.core_type<tc>, window_params = [{transform_indices = @transform_0, window_bounds = array<i64: 104, 32>}, {pipeline_mode = #tpu.pipeline_mode<synchronous>, transform_indices = @transform_1, window_bounds = array<i64: 32, 128>}, {pipeline_mode = #tpu.pipeline_mode<synchronous>, transform_indices = @transform_2, window_bounds = array<i64: 1, 128>}, {pipeline_mode = #tpu.pipeline_mode<synchronous>, transform_indices = @transform_3, window_bounds = array<i64: 128, 16>}, {pipeline_mode = #tpu.pipeline_mode<synchronous>, transform_indices = @transform_4, window_bounds = array<i64: 1, 16>}, {transform_indices = @transform_5, window_bounds = array<i64: 104, 16>}]} {
    %c0 = arith.constant 0 : index
    %c0_0 = arith.constant 0 : index
    %0 = vector.load %arg1[%c0, %c0_0] : memref<104x32xf32, #tpu.memory_space<vmem>>, vector<104x32xf32>
    %c0_1 = arith.constant 0 : index
    %c0_2 = arith.constant 0 : index
    %1 = vector.load %arg2[%c0_1, %c0_2] : memref<32x128xf32, #tpu.memory_space<vmem>>, vector<32x128xf32>
    %cst = arith.constant dense<0.000000e+00> : vector<104x128xf32>
    %2 = tpu.matmul %0, %1, %cst {dimension_numbers = #tpu.dot_dimension_numbers<[1], [0], [0], [1], [0, 0, 1, 1], [], []>} : vector<104x32xf32>, vector<32x128xf32>, vector<104x128xf32> -> vector<104x128xf32>
    %c0_3 = arith.constant 0 : index
    %c0_4 = arith.constant 0 : index
    %3 = vector.load %arg3[%c0_3, %c0_4] : memref<1x128xf32, #tpu.memory_space<vmem>>, vector<1x128xf32>
    %4 = vector.broadcast %3 : vector<1x128xf32> to vector<104x128xf32>
    %5 = arith.addf %2, %4 : vector<104x128xf32>
    %cst_5 = arith.constant 0.000000e+00 : f32
    %6 = vector.broadcast %cst_5 : f32 to vector<104x128xf32>
    %7 = arith.maximumf %5, %6 : vector<104x128xf32>
    %c0_6 = arith.constant 0 : index
    %c0_7 = arith.constant 0 : index
    %8 = vector.load %arg4[%c0_6, %c0_7] : memref<128x16xf32, #tpu.memory_space<vmem>>, vector<128x16xf32>
    %cst_8 = arith.constant dense<0.000000e+00> : vector<104x16xf32>
    %9 = tpu.matmul %7, %8, %cst_8 {dimension_numbers = #tpu.dot_dimension_numbers<[1], [0], [0], [1], [0, 0, 1, 1], [], []>} : vector<104x128xf32>, vector<128x16xf32>, vector<104x16xf32> -> vector<104x16xf32>
    %c0_9 = arith.constant 0 : index
    %c0_10 = arith.constant 0 : index
    %10 = vector.load %arg5[%c0_9, %c0_10] : memref<1x16xf32, #tpu.memory_space<vmem>>, vector<1x16xf32>
    %11 = vector.broadcast %10 : vector<1x16xf32> to vector<104x16xf32>
    %12 = arith.addf %9, %11 : vector<104x16xf32>
    %c0_11 = arith.constant 0 : index
    %c0_12 = arith.constant 0 : index
    %13 = vector.load %arg6[%c0_11, %c0_12] : memref<104x16xf32, #tpu.memory_space<vmem>>, vector<104x16xf32>
    tpu.vector_store %arg6[%c0_11, %c0_12], %12 {strides = array<i32>} : memref<104x16xf32, #tpu.memory_space<vmem>>, vector<104x16xf32>,
    return
  }
  func.func @transform_0(%arg0: i32) -> (i32, i32) {
    %c0_i32 = arith.constant 0 : i32
    %c0_i32_0 = arith.constant 0 : i32
    return %arg0, %c0_i32 : i32, i32
  }
  func.func @transform_1(%arg0: i32) -> (i32, i32) {
    %c0_i32 = arith.constant 0 : i32
    %c0_i32_0 = arith.constant 0 : i32
    %c0_i32_1 = arith.constant 0 : i32
    return %c0_i32, %c0_i32_0 : i32, i32
  }
  func.func @transform_2(%arg0: i32) -> (i32, i32) {
    %c0_i32 = arith.constant 0 : i32
    %c0_i32_0 = arith.constant 0 : i32
    %c0_i32_1 = arith.constant 0 : i32
    return %c0_i32, %c0_i32_0 : i32, i32
  }
  func.func @transform_3(%arg0: i32) -> (i32, i32) {
    %c0_i32 = arith.constant 0 : i32
    %c0_i32_0 = arith.constant 0 : i32
    %c0_i32_1 = arith.constant 0 : i32
    return %c0_i32, %c0_i32_0 : i32, i32
  }
  func.func @transform_4(%arg0: i32) -> (i32, i32) {
    %c0_i32 = arith.constant 0 : i32
    %c0_i32_0 = arith.constant 0 : i32
    %c0_i32_1 = arith.constant 0 : i32
    return %c0_i32, %c0_i32_0 : i32, i32
  }
  func.func @transform_5(%arg0: i32) -> (i32, i32) {
    %c0_i32 = arith.constant 0 : i32
    %c0_i32_0 = arith.constant 0 : i32
    return %arg0, %c0_i32 : i32, i32
  }
}

</mosaic_0001>

<llo_original>
// kernel: neural_network_forward.1
$region0: #{neural_network_forward.1}
  #allocation0 [shape = 'u32[]', space=smem, size = 0x4, offset = 0x4, fixed_abs, tag = 'smem constant byte address 0x4 - core index']
  #allocation1 [shape = 'u32[144,128]{1,0:T(1,128)}', space=vmem, size = 0x12000, scoped, tag = 'internal scratch']
  %s0 = inlined_call_operand.vmem [shape: f32[208,32], index: 0, kind: input, shape index: {}]
  %s1 = inlined_call_operand.vmem [shape: f32[32,128], index: 1, kind: input, shape index: {}]
  %s2 = inlined_call_operand.vmem [shape: f32[1,128], index: 2, kind: input, shape index: {}]
  %s3 = inlined_call_operand.vmem [shape: f32[128,16], index: 3, kind: input, shape index: {}]
  %s4 = inlined_call_operand.vmem [shape: f32[1,16], index: 4, kind: input, shape index: {}]
  %s5 = inlined_call_operand.vmem [shape: f32[208,16], index: 5, kind: output, shape index: {}]
  %s6 = sld [smem:[#allocation0]]
  $region53: #{neural_network_forward.1} parent=0
    _
  %s8 = ssub.s32 1, %s6
  %s9 = scalar_select 0, %s8, %s6
  loop: start=0, step=1, limit=4
  $region2: #{neural_network_forward.1} parent=0 // loop_pre_header
    _
  $region3: #{neural_network_forward.1} parent=0 // loop_header
    %s11 = sphi 0, %s15
    %p12 = scmp.ge.s32.totalorder %s11, 4
    %s21 = sphi 0, %s23
    %s24 = sphi 0, %s21
    %s25 = sphi 0, %s24
    %s41 = sphi 0, %s25
    %s45 = sphi 0, %s45
    %s47 = sphi 0, %s45
    %s48 = sphi 0, %s47
    %s62 = sphi 0, %s48
    %s66 = sphi 0, %s66
    %s68 = sphi 0, %s66
    %s69 = sphi 0, %s68
    %s83 = sphi 0, %s69
    %s87 = sphi 0, %s87
    %s89 = sphi 0, %s87
    %s90 = sphi 0, %s89
    %s104 = sphi 0, %s90
    %s108 = sphi 0, %s108
    %s110 = sphi 0, %s108
    %s111 = sphi 0, %s110
    %s125 = sphi 0, %s111
    %s131 = sphi 0, %s133
    %s134 = sphi 0, %s131
    %s135 = sphi 0, %s134
    %s151 = sphi 0, %s135
  $region4: #{neural_network_forward.1} parent=0 // loop_header_branch
    %14 = sbr.rel (%p12) target = $region8
  $region5: #{neural_network_forward.1} parent=0 // loop_body
    %s16 = ssub.s32 %s11, 1
    %s17 = ssub.s32 %s11, 2
    %s18 = sadd.s32 %s11, 1
    %s19 = ssub.s32 %s11, %s18
    %p20 = scmp.eq.s32.totalorder %s19, 0
    %s22 = sadd.s32 %s21, 1
    %s23 = scalar_select %p20, %s21, %s22
    %p26 = pneg %p20
    %p27 = scmp.eq.s32.totalorder %s11, 1
    %p28 = por %p26, %p27
    %p29 = scmp.ne.s32.totalorder %s21, %s24
    %p30 = scmp.eq.s32.totalorder %s11, 0
    %p31 = por %p29, %p30
    %p32 = scmp.ne.s32.totalorder %s21, %s24
    %p33 = scmp.eq.s32.totalorder %s16, 1
    %p34 = por %p32, %p33
    %p35 = scmp.ne.s32.totalorder %s24, %s25
    %p36 = scmp.eq.s32.totalorder %s16, 0
    %p37 = por %p35, %p36
    %p38 = scmp.ne.s32.totalorder %s24, %s25
    %p39 = scmp.eq.s32.totalorder %s17, 1
    %p40 = por %p38, %p39
    %p42 = scmp.ne.s32.totalorder %s25, %s41
    %p43 = scmp.eq.s32.totalorder %s17, 0
    %p44 = por %p42, %p43
    %s46 = sadd.s32 %s45, 1
    %p49 = scmp.eq.s32.totalorder %s11, 1
    %p50 = scmp.ne.s32.totalorder %s45, %s47
    %p51 = scmp.eq.s32.totalorder %s11, 0
    %p52 = por %p50, %p51
    %p53 = scmp.ne.s32.totalorder %s45, %s47
    %p54 = scmp.eq.s32.totalorder %s16, 1
    %p55 = por %p53, %p54
    %p56 = scmp.ne.s32.totalorder %s47, %s48
    %p57 = scmp.eq.s32.totalorder %s16, 0
    %p58 = por %p56, %p57
    %p59 = scmp.ne.s32.totalorder %s47, %s48
    %p60 = scmp.eq.s32.totalorder %s17, 1
    %p61 = por %p59, %p60
    %p63 = scmp.ne.s32.totalorder %s48, %s62
    %p64 = scmp.eq.s32.totalorder %s17, 0
    %p65 = por %p63, %p64
    %s67 = sadd.s32 %s66, 1
    %p70 = scmp.eq.s32.totalorder %s11, 1
    %p71 = scmp.ne.s32.totalorder %s66, %s68
    %p72 = scmp.eq.s32.totalorder %s11, 0
    %p73 = por %p71, %p72
    %p74 = scmp.ne.s32.totalorder %s66, %s68
    %p75 = scmp.eq.s32.totalorder %s16, 1
    %p76 = por %p74, %p75
    %p77 = scmp.ne.s32.totalorder %s68, %s69
    %p78 = scmp.eq.s32.totalorder %s16, 0
    %p79 = por %p77, %p78
    %p80 = scmp.ne.s32.totalorder %s68, %s69
    %p81 = scmp.eq.s32.totalorder %s17, 1
    %p82 = por %p80, %p81
    %p84 = scmp.ne.s32.totalorder %s69, %s83
    %p85 = scmp.eq.s32.totalorder %s17, 0
    %p86 = por %p84, %p85
    %s88 = sadd.s32 %s87, 1
    %p91 = scmp.eq.s32.totalorder %s11, 1
    %p92 = scmp.ne.s32.totalorder %s87, %s89
    %p93 = scmp.eq.s32.totalorder %s11, 0
    %p94 = por %p92, %p93
    %p95 = scmp.ne.s32.totalorder %s87, %s89
    %p96 = scmp.eq.s32.totalorder %s16, 1
    %p97 = por %p95, %p96
    %p98 = scmp.ne.s32.totalorder %s89, %s90
    %p99 = scmp.eq.s32.totalorder %s16, 0
    %p100 = por %p98, %p99
    %p101 = scmp.ne.s32.totalorder %s89, %s90
    %p102 = scmp.eq.s32.totalorder %s17, 1
    %p103 = por %p101, %p102
    %p105 = scmp.ne.s32.totalorder %s90, %s104
    %p106 = scmp.eq.s32.totalorder %s17, 0
    %p107 = por %p105, %p106
    %s109 = sadd.s32 %s108, 1
    %p112 = scmp.eq.s32.totalorder %s11, 1
    %p113 = scmp.ne.s32.totalorder %s108, %s110
    %p114 = scmp.eq.s32.totalorder %s11, 0
    %p115 = por %p113, %p114
    %p116 = scmp.ne.s32.totalorder %s108, %s110
    %p117 = scmp.eq.s32.totalorder %s16, 1
    %p118 = por %p116, %p117
    %p119 = scmp.ne.s32.totalorder %s110, %s111
    %p120 = scmp.eq.s32.totalorder %s16, 0
    %p121 = por %p119, %p120
    %p122 = scmp.ne.s32.totalorder %s110, %s111
    %p123 = scmp.eq.s32.totalorder %s17, 1
    %p124 = por %p122, %p123
    %p126 = scmp.ne.s32.totalorder %s111, %s125
    %p127 = scmp.eq.s32.totalorder %s17, 0
    %p128 = por %p126, %p127
    %s129 = ssub.s32 %s11, %s18
    %p130 = scmp.eq.s32.totalorder %s129, 0
    %s132 = sadd.s32 %s131, 1
    %s133 = scalar_select %p130, %s131, %s132
    %p136 = pneg %p130
    %p137 = scmp.eq.s32.totalorder %s11, 1
    %p138 = por %p136, %p137
    %p139 = scmp.ne.s32.totalorder %s131, %s134
    %p140 = scmp.eq.s32.totalorder %s11, 0
    %p141 = por %p139, %p140
    %p142 = scmp.ne.s32.totalorder %s131, %s134
    %p143 = scmp.eq.s32.totalorder %s16, 1
    %p144 = por %p142, %p143
    %p145 = scmp.ne.s32.totalorder %s134, %s135
    %p146 = scmp.eq.s32.totalorder %s16, 0
    %p147 = por %p145, %p146
    %p148 = scmp.ne.s32.totalorder %s134, %s135
    %p149 = scmp.eq.s32.totalorder %s17, 1
    %p150 = por %p148, %p149
    %p152 = scmp.ne.s32.totalorder %s135, %s151
    %p153 = scmp.eq.s32.totalorder %s17, 0
    %p154 = por %p152, %p153
    %p155 = scmp.le.s32.totalorder 1, %s11
    %p156 = scmp.lt.s32.totalorder %s11, 3
    %p157 = pnand %p155, %p156
    %p158 = pneg %p157
    // Predicated region
    $region9: #{neural_network_forward.1} parent=5 // pred_check
      _
    $region10: #{neural_network_forward.1} parent=5 // pred_check_branch
      %160 = sbr.rel (%p157) target = $region12
    $region11: #{neural_network_forward.1} parent=5 // pred_region
      %s161 = ssub.s32 %s11, 1
      // Predicated region
      $region13: #{neural_network_forward.1} parent=11 // pred_check
        %p162 = pneg %p58
      $region14: #{neural_network_forward.1} parent=11 // pred_check_branch
        %164 = sbr.rel (%p162) target = $region16
      $region15: #{neural_network_forward.1} parent=11 // pred_region
        _
      $region16: #{neural_network_forward.1} parent=11 // pred_fallthru
        _
      // Predicated region
      $region17: #{neural_network_forward.1} parent=11 // pred_check
        %p165 = pneg %p79
      $region18: #{neural_network_forward.1} parent=11 // pred_check_branch
        %167 = sbr.rel (%p165) target = $region20
      $region19: #{neural_network_forward.1} parent=11 // pred_region
        _
      $region20: #{neural_network_forward.1} parent=11 // pred_fallthru
        _
      // Predicated region
      $region21: #{neural_network_forward.1} parent=11 // pred_check
        %p168 = pneg %p100
      $region22: #{neural_network_forward.1} parent=11 // pred_check_branch
        %170 = sbr.rel (%p168) target = $region24
      $region23: #{neural_network_forward.1} parent=11 // pred_region
        _
      $region24: #{neural_network_forward.1} parent=11 // pred_fallthru
        _
      // Predicated region
      $region25: #{neural_network_forward.1} parent=11 // pred_check
        %p171 = pneg %p121
      $region26: #{neural_network_forward.1} parent=11 // pred_check_branch
        %173 = sbr.rel (%p171) target = $region28
      $region27: #{neural_network_forward.1} parent=11 // pred_region
        _
      $region28: #{neural_network_forward.1} parent=11 // pred_fallthru
        _
    $region12: #{neural_network_forward.1} parent=5 // pred_fallthru
      _
    %p174 = scmp.lt.s32.totalorder %s11, 2
    // Predicated region
    $region29: #{neural_network_forward.1} parent=5 // pred_check
      %p175 = pneg %p174
    $region30: #{neural_network_forward.1} parent=5 // pred_check_branch
      %177 = sbr.rel (%p175) target = $region32
    $region31: #{neural_network_forward.1} parent=5 // pred_region
      // Predicated region
      $region33: #{neural_network_forward.1} parent=31 // pred_check
        %p178 = pneg %p31
      $region34: #{neural_network_forward.1} parent=31 // pred_check_branch
        %180 = sbr.rel (%p178) target = $region36
      $region35: #{neural_network_forward.1} parent=31 // pred_region
        %s181 = smul.u32 13, %s11
        %p182 = scmp.lt.s32.totalorder %s181, 25
        %s183 = scalar_select %p182, %s181, 25
        %s184 = smul.addr %s183, 8
        %s185 = scalar_lea.vmem %s0, %s184
        %s186 = smul.u32 13, %s11
      $region36: #{neural_network_forward.1} parent=31 // pred_fallthru
        _
    $region32: #{neural_network_forward.1} parent=5 // pred_fallthru
      _
    %p187 = scmp.le.s32.totalorder 1, %s11
    %p188 = scmp.lt.s32.totalorder %s11, 3
    %p189 = pnand %p187, %p188
    %p190 = pneg %p189
    // Predicated region
    $region37: #{neural_network_forward.1} parent=5 // pred_check
      _
    $region38: #{neural_network_forward.1} parent=5 // pred_check_branch
      %192 = sbr.rel (%p189) target = $region40
    $region39: #{neural_network_forward.1} parent=5 // pred_region
      %s193 = ssub.s32 %s11, 1
      %s194 = smul.u32 13, %s16
      %p195 = scmp.lt.s32.totalorder %s194, 25
      %s196 = scalar_select %p195, %s194, 25
      %s197 = smul.addr %s196, 8
      %s198 = scalar_lea.vmem %s0, %s197
      %p199 = pneg %p37
      %p200 = pneg %p34
      %p201 = pneg %p58
      %p202 = pneg %p55
      %p203 = pneg %p79
      %p204 = pneg %p76
      %p205 = pneg %p100
      %p206 = pneg %p97
      %p207 = pneg %p121
      %p208 = pneg %p118
      %p209 = pneg %p147
      %p210 = pneg %p144
      %s211 = smul.u32 13, %s16
      %p212 = scmp.lt.s32.totalorder %s211, 25
      %s213 = scalar_select %p212, %s211, 25
      %s214 = smul.addr %s213, 8
      %s215 = scalar_lea.vmem %s5, %s214
      %s216 = smul.u32 13, %s16
      %p217 = scmp.lt.s32.totalorder %s216, 25
      %s218 = scalar_select %p217, %s216, 25
      %s219 = smul.addr %s218, 8
      %s220 = scalar_lea.vmem %s0, %s219
      %s221 = smul.u32 13, %s16
      %s222 = smul.u32 13, %s16
      %p223 = scmp.lt.s32.totalorder %s222, 25
      %s224 = scalar_select %p223, %s222, 25
      %s225 = smul.addr %s224, 8
      %s226 = scalar_lea.vmem %s5, %s225
      %s227 = smul.u32 13, %s16
      %v228 = vld [vmem:[%s220] sm:$0xff]
      %v229 = vld [vmem:[%s220 + $0x8] sm:$0xff]
      %v230 = vld [vmem:[%s220 + $0x10] sm:$0xff]
      %v231 = vld [vmem:[%s220 + $0x18] sm:$0xff]
      %v232 = vld [vmem:[%s220 + $0x20] sm:$0xff]
      %v233 = vld [vmem:[%s220 + $0x28] sm:$0xff]
      %v234 = vld [vmem:[%s220 + $0x30] sm:$0xff]
      %v235 = vld [vmem:[%s220 + $0x38] sm:$0xff]
      %v236 = vld [vmem:[%s220 + $0x40] sm:$0xff]
      %v237 = vld [vmem:[%s220 + $0x48] sm:$0xff]
      %v238 = vld [vmem:[%s220 + $0x50] sm:$0xff]
      %v239 = vld [vmem:[%s220 + $0x58] sm:$0xff]
      %v240 = vld [vmem:[%s220 + $0x60] sm:$0xff]
      %v241 = vld [vmem:[%s1] sm:$0xff]
      %v242 = vld [vmem:[%s1 + $0x8] sm:$0xff]
      %v243 = vld [vmem:[%s1 + $0x10] sm:$0xff]
      %v244 = vld [vmem:[%s1 + $0x18] sm:$0xff]
      %v245 = vld [vmem:[%s2] sm:$0x1]
      %v247 = vlaneseq
      %v248 = vshrl.u32 %v247, 7
      %v249 = vsub.s32 0, %v248
      %v250 = vrot.slane %v245, %v249
      %vm252 = vcmask 261120
      %v254 = vsel %vm252, %v228, 0
      %v257 = vsel %vm252, %v229, 0
      %v260 = vsel %vm252, %v230, 0
      %v263 = vsel %vm252, %v231, 0
      %v266 = vsel %vm252, %v232, 0
      %v269 = vsel %vm252, %v233, 0
      %v272 = vsel %vm252, %v234, 0
      %v275 = vsel %vm252, %v235, 0
      %v278 = vsel %vm252, %v236, 0
      %v281 = vsel %vm252, %v237, 0
      %v284 = vsel %vm252, %v238, 0
      %v287 = vsel %vm252, %v239, 0
      %v290 = vsel %vm252, %v240, 0
      %292 = vmatprep.subr.mxu0 0.0
      %293 = vmatpush1.msra.mxu0 0.0
      %294 = vmatprep.subr.mxu0 0.0
      %295 = vmatpush1.msra.mxu0 0.0
      %296 = vmatprep.subr.mxu0 0.0
      %297 = vmatpush1.msra.mxu0 0.0
      %298 = vmatprep.subr.mxu0 0.0
      %299 = vmatpush1.msra.mxu0 0.0
      %300 = vmatprep.subr.mxu0 0.0
      %301 = vmatpush1.msra.mxu0 0.0
      %302 = vmatprep.subr.mxu0 0.0
      %303 = vmatpush1.msra.mxu0 0.0
      %304 = vmatprep.subr.mxu0 0.0
      %305 = vmatpush1.msra.mxu0 0.0
      %306 = vmatprep.subr.mxu0 0.0
      %307 = vmatpush1.msra.mxu0 0.0
      %308 = vmatprep.subr.mxu0 0.0
      %309 = vmatpush1.msra.mxu0 0.0
      %310 = vmatprep.subr.mxu0 0.0
      %311 = vmatpush1.msra.mxu0 0.0
      %312 = vmatprep.subr.mxu0 0.0
      %313 = vmatpush1.msra.mxu0 0.0
      %314 = vmatprep.subr.mxu0 0.0
      %315 = vmatpush1.msra.mxu0 0.0
      %316 = vmatprep.subr.mxu0 0.0
      %317 = vmatpush1.msra.mxu0 %v244
      %318 = vmatprep.subr.mxu0 0.0
      %319 = vmatpush1.msra.mxu0 %v243
      %320 = vmatprep.subr.mxu0 0.0
      %321 = vmatpush1.msra.mxu0 %v242
      %322 = vmatprep.subr.mxu0 0.0
      %323 = vmatpush1.msra.mxu0 %v241
      %324 = vmatprep.subr.mxu0 0.0
      %325 = vmatpush2.msra.mxu0 0.0
      %326 = vmatprep.subr.mxu0 0.0
      %327 = vmatpush2.msra.mxu0 0.0
      %328 = vmatprep.subr.mxu0 0.0
      %329 = vmatpush2.msra.mxu0 0.0
      %330 = vmatprep.subr.mxu0 0.0
      %331 = vmatpush2.msra.mxu0 0.0
      %332 = vmatprep.subr.mxu0 0.0
      %333 = vmatpush2.msra.mxu0 0.0
      %334 = vmatprep.subr.mxu0 0.0
      %335 = vmatpush2.msra.mxu0 0.0
      %336 = vmatprep.subr.mxu0 0.0
      %337 = vmatpush2.msra.mxu0 0.0
      %338 = vmatprep.subr.mxu0 0.0
      %339 = vmatpush2.msra.mxu0 0.0
      %340 = vmatprep.subr.mxu0 0.0
      %341 = vmatpush2.msra.mxu0 0.0
      %342 = vmatprep.subr.mxu0 0.0
      %343 = vmatpush2.msra.mxu0 0.0
      %344 = vmatprep.subr.mxu0 0.0
      %345 = vmatpush2.msra.mxu0 0.0
      %346 = vmatprep.subr.mxu0 0.0
      %347 = vmatpush2.msra.mxu0 0.0
      %348 = vmatprep.subr.mxu0 0.0
      %349 = vmatpush2.msra.mxu0 0.0
      %350 = vmatprep.subr.mxu0 0.0
      %351 = vmatpush2.msra.mxu0 0.0
      %352 = vmatprep.subr.mxu0 0.0
      %353 = vmatpush2.msra.mxu0 0.0
      %354 = vmatprep.subr.mxu0 0.0
      %355 = vmatpush2.msra.mxu0 0.0
      %356 = vmatprep.mubr.f32.mxu0 0.0
      %357 = vmatmul.mubr.f32.gmra.mxu0 %v254
      %v358 = vpop.f32.mrf.mxu0
      %v359 = vadd.f32 %v250, %v358
      %v360 = vpop.f32.mrf.mxu0
      %361 = vmatprep.mubr.f32.mxu0 0.0
      %362 = vmatmul.mubr.f32.gmra.mxu0 %v257
      %v363 = vpop.f32.mrf.mxu0
      %v364 = vadd.f32 %v250, %v363
      %v365 = vpop.f32.mrf.mxu0
      %366 = vmatprep.mubr.f32.mxu0 0.0
      %367 = vmatmul.mubr.f32.gmra.mxu0 %v260
      %v368 = vpop.f32.mrf.mxu0
      %v369 = vadd.f32 %v250, %v368
      %v370 = vpop.f32.mrf.mxu0
      %371 = vmatprep.mubr.f32.mxu0 0.0
      %372 = vmatmul.mubr.f32.gmra.mxu0 %v263
      %v373 = vpop.f32.mrf.mxu0
      %v374 = vadd.f32 %v250, %v373
      %v375 = vpop.f32.mrf.mxu0
      %376 = vmatprep.mubr.f32.mxu0 0.0
      %377 = vmatmul.mubr.f32.gmra.mxu0 %v266
      %v378 = vpop.f32.mrf.mxu0
      %v379 = vadd.f32 %v250, %v378
      %v380 = vpop.f32.mrf.mxu0
      %381 = vmatprep.mubr.f32.mxu0 0.0
      %382 = vmatmul.mubr.f32.gmra.mxu0 %v269
      %v383 = vpop.f32.mrf.mxu0
      %v384 = vadd.f32 %v250, %v383
      %v385 = vpop.f32.mrf.mxu0
      %386 = vmatprep.mubr.f32.mxu0 0.0
      %387 = vmatmul.mubr.f32.gmra.mxu0 %v272
      %v388 = vpop.f32.mrf.mxu0
      %v389 = vadd.f32 %v250, %v388
      %v390 = vpop.f32.mrf.mxu0
      %391 = vmatprep.mubr.f32.mxu0 0.0
      %392 = vmatmul.mubr.f32.gmra.mxu0 %v275
      %v393 = vpop.f32.mrf.mxu0
      %v394 = vadd.f32 %v250, %v393
      %v395 = vpop.f32.mrf.mxu0
      %396 = vmatprep.mubr.f32.mxu0 0.0
      %397 = vmatmul.mubr.f32.gmra.mxu0 %v278
      %v398 = vpop.f32.mrf.mxu0
      %v399 = vadd.f32 %v250, %v398
      %v400 = vpop.f32.mrf.mxu0
      %401 = vmatprep.mubr.f32.mxu0 0.0
      %402 = vmatmul.mubr.f32.gmra.mxu0 %v281
      %v403 = vpop.f32.mrf.mxu0
      %v404 = vadd.f32 %v250, %v403
      %v405 = vpop.f32.mrf.mxu0
      %406 = vmatprep.mubr.f32.mxu0 0.0
      %407 = vmatmul.mubr.f32.gmra.mxu0 %v284
      %v408 = vpop.f32.mrf.mxu0
      %v409 = vadd.f32 %v250, %v408
      %v410 = vpop.f32.mrf.mxu0
      %411 = vmatprep.mubr.f32.mxu0 0.0
      %412 = vmatmul.mubr.f32.gmra.mxu0 %v287
      %v413 = vpop.f32.mrf.mxu0
      %v414 = vadd.f32 %v250, %v413
      %v415 = vpop.f32.mrf.mxu0
      %416 = vmatprep.mubr.f32.mxu0 0.0
      %417 = vmatmul.mubr.f32.gmra.mxu0 %v290
      %v418 = vpop.f32.mrf.mxu0
      %v419 = vadd.f32 %v250, %v418
      %v420 = vpop.f32.mrf.mxu0
      %421 = vdwg.mxu0
      %v422 = vmax.f32 %v359, 0.0
      %v423 = vmax.f32 %v364, 0.0
      %v424 = vmax.f32 %v369, 0.0
      %v425 = vmax.f32 %v374, 0.0
      %v426 = vmax.f32 %v379, 0.0
      %v427 = vmax.f32 %v384, 0.0
      %v428 = vmax.f32 %v389, 0.0
      %v429 = vmax.f32 %v394, 0.0
      %v430 = vmax.f32 %v399, 0.0
      %v431 = vmax.f32 %v404, 0.0
      %v432 = vmax.f32 %v409, 0.0
      %v433 = vmax.f32 %v414, 0.0
      %v434 = vmax.f32 %v419, 0.0
      %v435 = vld [vmem:[%s3] sm:$0xff]
      %v436 = vld [vmem:[%s3 + $0x8] sm:$0xff]
      %v437 = vld [vmem:[%s3 + $0x10] sm:$0xff]
      %v438 = vld [vmem:[%s3 + $0x18] sm:$0xff]
      %v439 = vld [vmem:[%s3 + $0x20] sm:$0xff]
      %v440 = vld [vmem:[%s3 + $0x28] sm:$0xff]
      %v441 = vld [vmem:[%s3 + $0x30] sm:$0xff]
      %v442 = vld [vmem:[%s3 + $0x38] sm:$0xff]
      %v443 = vld [vmem:[%s3 + $0x40] sm:$0xff]
      %v444 = vld [vmem:[%s3 + $0x48] sm:$0xff]
      %v445 = vld [vmem:[%s3 + $0x50] sm:$0xff]
      %v446 = vld [vmem:[%s3 + $0x58] sm:$0xff]
      %v447 = vld [vmem:[%s3 + $0x60] sm:$0xff]
      %v448 = vld [vmem:[%s3 + $0x68] sm:$0xff]
      %v449 = vld [vmem:[%s3 + $0x70] sm:$0xff]
      %v450 = vld [vmem:[%s3 + $0x78] sm:$0xff]
      %v451 = vld [vmem:[%s4] sm:$0x1]
      %v453 = vlaneseq
      %v454 = vshrl.u32 %v453, 7
      %v455 = vsub.s32 0, %v454
      %v456 = vrot.slane %v451, %v455
      %458 = vmatprep.subr.mxu0 0.0
      %459 = vmatpush1.msra.mxu0 %v450
      %460 = vmatprep.subr.mxu0 0.0
      %461 = vmatpush1.msra.mxu0 %v449
      %462 = vmatprep.subr.mxu0 0.0
      %463 = vmatpush1.msra.mxu0 %v448
      %464 = vmatprep.subr.mxu0 0.0
      %465 = vmatpush1.msra.mxu0 %v447
      %466 = vmatprep.subr.mxu0 0.0
      %467 = vmatpush1.msra.mxu0 %v446
      %468 = vmatprep.subr.mxu0 0.0
      %469 = vmatpush1.msra.mxu0 %v445
      %470 = vmatprep.subr.mxu0 0.0
      %471 = vmatpush1.msra.mxu0 %v444
      %472 = vmatprep.subr.mxu0 0.0
      %473 = vmatpush1.msra.mxu0 %v443
      %474 = vmatprep.subr.mxu0 0.0
      %475 = vmatpush1.msra.mxu0 %v442
      %476 = vmatprep.subr.mxu0 0.0
      %477 = vmatpush1.msra.mxu0 %v441
      %478 = vmatprep.subr.mxu0 0.0
      %479 = vmatpush1.msra.mxu0 %v440
      %480 = vmatprep.subr.mxu0 0.0
      %481 = vmatpush1.msra.mxu0 %v439
      %482 = vmatprep.subr.mxu0 0.0
      %483 = vmatpush1.msra.mxu0 %v438
      %484 = vmatprep.subr.mxu0 0.0
      %485 = vmatpush1.msra.mxu0 %v437
      %486 = vmatprep.subr.mxu0 0.0
      %487 = vmatpush1.msra.mxu0 %v436
      %488 = vmatprep.subr.mxu0 0.0
      %489 = vmatpush1.msra.mxu0 %v435
      %490 = vmatprep.subr.mxu0 0.0
      %491 = vmatpush2.msra.mxu0 0.0
      %492 = vmatprep.subr.mxu0 0.0
      %493 = vmatpush2.msra.mxu0 0.0
      %494 = vmatprep.subr.mxu0 0.0
      %495 = vmatpush2.msra.mxu0 0.0
      %496 = vmatprep.subr.mxu0 0.0
      %497 = vmatpush2.msra.mxu0 0.0
      %498 = vmatprep.subr.mxu0 0.0
      %499 = vmatpush2.msra.mxu0 0.0
      %500 = vmatprep.subr.mxu0 0.0
      %501 = vmatpush2.msra.mxu0 0.0
      %502 = vmatprep.subr.mxu0 0.0
      %503 = vmatpush2.msra.mxu0 0.0
      %504 = vmatprep.subr.mxu0 0.0
      %505 = vmatpush2.msra.mxu0 0.0
      %506 = vmatprep.subr.mxu0 0.0
      %507 = vmatpush2.msra.mxu0 0.0
      %508 = vmatprep.subr.mxu0 0.0
      %509 = vmatpush2.msra.mxu0 0.0
      %510 = vmatprep.subr.mxu0 0.0
      %511 = vmatpush2.msra.mxu0 0.0
      %512 = vmatprep.subr.mxu0 0.0
      %513 = vmatpush2.msra.mxu0 0.0
      %514 = vmatprep.subr.mxu0 0.0
      %515 = vmatpush2.msra.mxu0 0.0
      %516 = vmatprep.subr.mxu0 0.0
      %517 = vmatpush2.msra.mxu0 0.0
      %518 = vmatprep.subr.mxu0 0.0
      %519 = vmatpush2.msra.mxu0 0.0
      %520 = vmatprep.subr.mxu0 0.0
      %521 = vmatpush2.msra.mxu0 0.0
      %522 = vmatprep.mubr.f32.mxu0 0.0
      %523 = vmatmul.mubr.f32.gmra.mxu0 %v422
      %v524 = vpop.f32.mrf.mxu0
      %v525 = vadd.f32 %v456, %v524
      %v526 = vpop.f32.mrf.mxu0
      %527 = vmatprep.mubr.f32.mxu0 0.0
      %528 = vmatmul.mubr.f32.gmra.mxu0 %v423
      %v529 = vpop.f32.mrf.mxu0
      %v530 = vadd.f32 %v456, %v529
      %v531 = vpop.f32.mrf.mxu0
      %532 = vmatprep.mubr.f32.mxu0 0.0
      %533 = vmatmul.mubr.f32.gmra.mxu0 %v424
      %v534 = vpop.f32.mrf.mxu0
      %v535 = vadd.f32 %v456, %v534
      %v536 = vpop.f32.mrf.mxu0
      %537 = vmatprep.mubr.f32.mxu0 0.0
      %538 = vmatmul.mubr.f32.gmra.mxu0 %v425
      %v539 = vpop.f32.mrf.mxu0
      %v540 = vadd.f32 %v456, %v539
      %v541 = vpop.f32.mrf.mxu0
      %542 = vmatprep.mubr.f32.mxu0 0.0
      %543 = vmatmul.mubr.f32.gmra.mxu0 %v426
      %v544 = vpop.f32.mrf.mxu0
      %v545 = vadd.f32 %v456, %v544
      %v546 = vpop.f32.mrf.mxu0
      %547 = vmatprep.mubr.f32.mxu0 0.0
      %548 = vmatmul.mubr.f32.gmra.mxu0 %v427
      %v549 = vpop.f32.mrf.mxu0
      %v550 = vadd.f32 %v456, %v549
      %v551 = vpop.f32.mrf.mxu0
      %552 = vmatprep.mubr.f32.mxu0 0.0
      %553 = vmatmul.mubr.f32.gmra.mxu0 %v428
      %v554 = vpop.f32.mrf.mxu0
      %v555 = vadd.f32 %v456, %v554
      %v556 = vpop.f32.mrf.mxu0
      %557 = vmatprep.mubr.f32.mxu0 0.0
      %558 = vmatmul.mubr.f32.gmra.mxu0 %v429
      %v559 = vpop.f32.mrf.mxu0
      %v560 = vadd.f32 %v456, %v559
      %v561 = vpop.f32.mrf.mxu0
      %562 = vmatprep.mubr.f32.mxu0 0.0
      %563 = vmatmul.mubr.f32.gmra.mxu0 %v430
      %v564 = vpop.f32.mrf.mxu0
      %v565 = vadd.f32 %v456, %v564
      %v566 = vpop.f32.mrf.mxu0
      %567 = vmatprep.mubr.f32.mxu0 0.0
      %568 = vmatmul.mubr.f32.gmra.mxu0 %v431
      %v569 = vpop.f32.mrf.mxu0
      %v570 = vadd.f32 %v456, %v569
      %v571 = vpop.f32.mrf.mxu0
      %572 = vmatprep.mubr.f32.mxu0 0.0
      %573 = vmatmul.mubr.f32.gmra.mxu0 %v432
      %v574 = vpop.f32.mrf.mxu0
      %v575 = vadd.f32 %v456, %v574
      %v576 = vpop.f32.mrf.mxu0
      %577 = vmatprep.mubr.f32.mxu0 0.0
      %578 = vmatmul.mubr.f32.gmra.mxu0 %v433
      %v579 = vpop.f32.mrf.mxu0
      %v580 = vadd.f32 %v456, %v579
      %v581 = vpop.f32.mrf.mxu0
      %582 = vmatprep.mubr.f32.mxu0 0.0
      %583 = vmatmul.mubr.f32.gmra.mxu0 %v434
      %v584 = vpop.f32.mrf.mxu0
      %v585 = vadd.f32 %v456, %v584
      %v586 = vpop.f32.mrf.mxu0
      %587 = vdwg.mxu0
      %vm588 = vcmask 130048
      %589 = vst.msk [vmem:[%s226] sm:$0xff] %vm588, %v525
      %590 = vst.msk [vmem:[%s226 + $0x8] sm:$0xff] %vm588, %v530
      %591 = vst.msk [vmem:[%s226 + $0x10] sm:$0xff] %vm588, %v535
      %592 = vst.msk [vmem:[%s226 + $0x18] sm:$0xff] %vm588, %v540
      %593 = vst.msk [vmem:[%s226 + $0x20] sm:$0xff] %vm588, %v545
      %594 = vst.msk [vmem:[%s226 + $0x28] sm:$0xff] %vm588, %v550
      %595 = vst.msk [vmem:[%s226 + $0x30] sm:$0xff] %vm588, %v555
      %596 = vst.msk [vmem:[%s226 + $0x38] sm:$0xff] %vm588, %v560
      %597 = vst.msk [vmem:[%s226 + $0x40] sm:$0xff] %vm588, %v565
      %598 = vst.msk [vmem:[%s226 + $0x48] sm:$0xff] %vm588, %v570
      %599 = vst.msk [vmem:[%s226 + $0x50] sm:$0xff] %vm588, %v575
      %600 = vst.msk [vmem:[%s226 + $0x58] sm:$0xff] %vm588, %v580
      %601 = vst.msk [vmem:[%s226 + $0x60] sm:$0xff] %vm588, %v585
      %s602 = smul.u32 13, %s16
      %p603 = scmp.lt.s32.totalorder %s602, 25
      %s604 = scalar_select %p603, %s602, 25
      %s605 = smul.addr %s604, 8
      %s606 = scalar_lea.vmem %s5, %s605
      // Predicated region
      $region41: #{neural_network_forward.1} parent=39 // pred_check
        %p607 = pneg %p144
      $region42: #{neural_network_forward.1} parent=39 // pred_check_branch
        %609 = sbr.rel (%p607) target = $region44
      $region43: #{neural_network_forward.1} parent=39 // pred_region
        %s610 = smul.u32 13, %s16
      $region44: #{neural_network_forward.1} parent=39 // pred_fallthru
        _
    $region40: #{neural_network_forward.1} parent=5 // pred_fallthru
      _
    %p611 = scmp.le.s32.totalorder 2, %s11
    // Predicated region
    $region45: #{neural_network_forward.1} parent=5 // pred_check
      %p612 = pneg %p611
    $region46: #{neural_network_forward.1} parent=5 // pred_check_branch
      %614 = sbr.rel (%p612) target = $region48
    $region47: #{neural_network_forward.1} parent=5 // pred_region
      %s615 = ssub.s32 %s11, 2
      // Predicated region
      $region49: #{neural_network_forward.1} parent=47 // pred_check
        %p616 = pneg %p150
      $region50: #{neural_network_forward.1} parent=47 // pred_check_branch
        %618 = sbr.rel (%p616) target = $region52
      $region51: #{neural_network_forward.1} parent=47 // pred_region
        %s619 = smul.u32 13, %s17
        %p620 = scmp.lt.s32.totalorder %s619, 25
        %s621 = scalar_select %p620, %s619, 25
        %s622 = smul.addr %s621, 8
        %s623 = scalar_lea.vmem %s5, %s622
      $region52: #{neural_network_forward.1} parent=47 // pred_fallthru
        _
    $region48: #{neural_network_forward.1} parent=5 // pred_fallthru
      _
  $region6: #{neural_network_forward.1} parent=0 // loop_footer
    %s15 = sadd.s32 1, %s11
  $region7: #{neural_network_forward.1} parent=0 // loop_footer_branch
    %10 = sbr.rel target = $region3
  $region8: #{neural_network_forward.1} parent=0 // loop_exit
    _

</llo_original>
